<compile_context>
chip_gen: v6e
topology: v6e:2x2x1
jax: 0.10.0
libtpu: 0.0.40
codegen_flags: <defaults>
</compile_context>

<pallas_src>
import functools

import jax
import jax.numpy as jnp
from jax.experimental import pallas as pl
from jax.experimental.pallas import tpu as pltpu


# ------------------------------ small helpers --------------------------------

def _cdiv(a, b):
    return -(-a // b)


def _round_up(a, b):
    return _cdiv(a, b) * b


def _pick_vmem_limit(needed_bytes, vmem_cap):
    # At least the 32 MiB default scoped limit when it fits, plus slack for the
    # actual need, but NEVER above the physical per-core capacity.
    want = max(int(needed_bytes) + (2 << 20), 32 << 20)
    return int(min(want, vmem_cap))


def _sublane_pack(itemsize):
    # f32 -> 8, bf16 -> 16, int8/fp8 -> 32 rows per vreg sublane tile.
    return max(8, 32 // max(1, itemsize))


# ----------------------------- shared MLP -------------------------------------

def _mlp_scale(pools, wa, wb, use_mxu):
    """pools: (2, C) f32 -> sigmoid(fc2(relu(fc1(avg))) + fc2(relu(fc1(max)))).

    Returns (1, C) f32.  Weight orientation depends on the path:
      use_mxu=True : wa = w1.T (C, R), wb = w2.T (R, C)   (MXU dots)
      use_mxu=False: wa = w1   (R, C), wb = w2   (C, R)   (VPU reduce)
    """
    if use_mxu:
        h = jnp.maximum(
            jnp.dot(pools, wa, preferred_element_type=jnp.float32), 0.0)      # (2, R)
        out = jnp.dot(h, wb, preferred_element_type=jnp.float32)               # (2, C)
    else:
        # Broadcast-multiply + lane reduce: avoids padding a (2, C)x(C, R<=8)
        # matmul out to a full MXU tile.
        h = jnp.maximum(
            jnp.sum(pools[:, None, :] * wa[None, :, :], axis=-1), 0.0)          # (2, R)
        out = jnp.sum(h[:, None, :] * wb[None, :, :], axis=-1)                  # (2, C)
    return jax.nn.sigmoid(out[0:1, :] + out[1:2, :])                            # (1, C)


# --------------------------- resident (1 pass) ---------------------------------

def _cab_resident_kernel(x_ref, wa_ref, wb_ref, o_ref, *, hw_actual, use_mxu):
    # x_ref: (1, C, HW) in the input dtype (HW = true logical extent; Mosaic
    # masks any physical lane padding in the reductions, so no where-temp and
    # no extra VPU work is needed).  Weights are full blocks; o_ref like x.
    x = x_ref[...]
    avg = jnp.sum(x, axis=-1, dtype=jnp.float32) * (1.0 / float(hw_actual))    # (1, C)
    mx = jnp.max(x, axis=-1).astype(jnp.float32)                                # (1, C)
    pools = jnp.concatenate([avg, mx], axis=0)                                  # (2, C)

    scale = _mlp_scale(pools, wa_ref[...], wb_ref[...], use_mxu)                # (1, C) f32
    # Final multiply stays in the input dtype (no f32 upcast of the full block).
    o_ref[...] = x * scale.astype(x.dtype)[:, :, None]


def _cab_resident(x, wa, wb, use_mxu, needed_bytes, vmem_cap, alias_input):
    B, C, H, W = x.shape
    HW = H * W
    x_flat = x.reshape(B, C, HW)     # contiguous reshape: metadata-only, free

    # TODO(synk): when B == 1 the (B,)-parallel grid leaves one v7x TensorCore
    # idle; a batch/C fold (or preferring the tiled path) would cover megacore.
    kern = functools.partial(_cab_resident_kernel, hw_actual=HW, use_mxu=use_mxu)

    out = pl.pallas_call(
        kern,
        out_shape=jax.ShapeDtypeStruct((B, C, HW), x.dtype),
        grid_spec=pltpu.PrefetchScalarGridSpec(
            num_scalar_prefetch=0,
            grid=(B,),
            in_specs=[
                pl.BlockSpec((1, C, HW), lambda b: (b, 0, 0)),
                pl.BlockSpec(wa.shape, lambda b: (0, 0)),
                pl.BlockSpec(wb.shape, lambda b: (0, 0)),
            ],
            out_specs=pl.BlockSpec((1, C, HW), lambda b: (b, 0, 0)),
        ),
        compiler_params=pltpu.CompilerParams(
            dimension_semantics=("parallel",),
            vmem_limit_bytes=_pick_vmem_limit(needed_bytes, vmem_cap)),
        input_output_aliases=({0: 0} if alias_input else {}),
    )(x_flat, wa, wb)

    return out.reshape(B, C, H, W)


# ---------------------------- tiled (2 passes) ---------------------------------

def _cab_pool_kernel(x_ref, wa_ref, wb_ref, scale_ref, sum_acc, max_acc, *,
                     hw_actual, rem, use_mxu):
    # x_ref: (1, C, tile); scale_ref: (1, C, 1) f32; scratch: (1, C) f32 each.
    # rem (static): valid lanes in the LAST tile (0 => last tile is full).
    t = pl.program_id(1)
    n_t = pl.num_programs(1)

    @pl.when(t == 0)
    def _init():
        sum_acc[...] = jnp.zeros_like(sum_acc)
        max_acc[...] = jnp.full_like(max_acc, -jnp.inf)

    x = x_ref[...]

    if rem == 0:
        # Every tile is full -> no masking anywhere.
        sum_acc[...] += jnp.sum(x, axis=-1, dtype=jnp.float32)                  # (1, C)
        max_acc[...] = jnp.maximum(max_acc[...],
                                   jnp.max(x, axis=-1).astype(jnp.float32))
    else:
        # Only the partial last tile pays for the masking (Pallas leaves its
        # out-of-bounds lanes undefined, so BOTH sum and max must be masked).
        @pl.when(t < n_t - 1)
        def _full():
            sum_acc[...] += jnp.sum(x, axis=-1, dtype=jnp.float32)
            max_acc[...] = jnp.maximum(max_acc[...],
                                       jnp.max(x, axis=-1).astype(jnp.float32))

        @pl.when(t == n_t - 1)
        def _tail():
            lane = jax.lax.broadcasted_iota(jnp.int32, x.shape, 2)
            valid = lane < rem
            # -inf sentinel assumes a floating-point input dtype (as in CAB).
            xs = jnp.where(valid, x, jnp.zeros((), x.dtype))
            xm = jnp.where(valid, x, jnp.array(-jnp.inf, x.dtype))
            sum_acc[...] += jnp.sum(xs, axis=-1, dtype=jnp.float32)
            max_acc[...] = jnp.maximum(max_acc[...],
                                       jnp.max(xm, axis=-1).astype(jnp.float32))

    @pl.when(t == n_t - 1)
    def _finalize():
        avg = sum_acc[...] * (1.0 / float(hw_actual))                           # (1, C)
        pools = jnp.concatenate([avg, max_acc[...]], axis=0)                    # (2, C)
        scale = _mlp_scale(pools, wa_ref[...], wb_ref[...], use_mxu)            # (1, C)
        scale_ref[...] = scale[:, :, None]                                      # (1, C, 1)


def _cab_scale_kernel(x_ref, scale_ref, o_ref):
    # x_ref: (1, C, tile); scale_ref: (1, C, 1) f32; o_ref like x.
    # Out-of-bounds lanes of a partial last block hold garbage on input, but
    # their stores are dropped by Pallas, so no masking is needed here.
    x = x_ref[...]
    o_ref[...] = x * scale_ref[...].astype(x.dtype)


def _cab_tiled(x, wa, wb, use_mxu, max_block_bytes, vmem_cap, alias_input):
    B, C, H, W = x.shape
    HW = H * W
    itemsize = x.dtype.itemsize
    c_pad = _round_up(C, _sublane_pack(itemsize))   # honest sublane-padded C
    hw128 = _round_up(HW, 128)
    row_bytes = c_pad * itemsize                    # physical bytes per lane column

    def pick_tile(budget_bytes):
        # Lane tile: multiple of 128, as large as the budget allows.
        # TODO(synk): for very large C the tile collapses to 128 lanes (short
        # strided DMA rows); a C grid axis would keep chunks >= ~2 KB on v5e.
        t = max(128, (budget_bytes // row_bytes) // 128 * 128)
        return min(t, hw128)

    # Pass 2 double-buffers input + output (4 tile-sized blocks); pass 1 only
    # double-buffers its input (2 blocks), so its tile can be ~2x larger within
    # the same VMEM budget -> fewer grid steps / DMAs on half the traffic.
    tile2 = pick_tile(max_block_bytes)
    tile1 = pick_tile(2 * max_block_bytes)
    n1 = _cdiv(HW, tile1)
    n2 = _cdiv(HW, tile2)
    rem1 = HW % tile1            # 0 -> last pass-1 tile is full (no masking)

    x_flat = x.reshape(B, C, HW)   # free reshape; NO HBM pad / slice anywhere

    vlim1 = _pick_vmem_limit(2 * row_bytes * tile1 + (1 << 20), vmem_cap)
    vlim2 = _pick_vmem_limit(4 * row_bytes * tile2 + (1 << 20), vmem_cap)

    # Pass 1: per-(batch, tile) pooling reduction -> per-batch channel scale.
    pool_kern = functools.partial(_cab_pool_kernel, hw_actual=HW, rem=rem1,
                                  use_mxu=use_mxu)
    scale = pl.pallas_call(
        pool_kern,
        out_shape=jax.ShapeDtypeStruct((B, C, 1), jnp.float32),
        grid_spec=pltpu.PrefetchScalarGridSpec(
            num_scalar_prefetch=0,
            grid=(B, n1),
            in_specs=[
                pl.BlockSpec((1, C, tile1), lambda b, t: (b, 0, t)),
                pl.BlockSpec(wa.shape, lambda b, t: (0, 0)),
                pl.BlockSpec(wb.shape, lambda b, t: (0, 0)),
            ],
            out_specs=pl.BlockSpec((1, C, 1), lambda b, t: (b, 0, 0)),
            scratch_shapes=[pltpu.VMEM((1, C), jnp.float32),
                            pltpu.VMEM((1, C), jnp.float32)],
        ),
        compiler_params=pltpu.CompilerParams(
            dimension_semantics=("parallel", "arbitrary"),
            vmem_limit_bytes=vlim1),
    )(x_flat, wa, wb)

    # Pass 2: lane-dense elementwise scaling of each (batch, tile) block.
    out = pl.pallas_call(
        _cab_scale_kernel,
        out_shape=jax.ShapeDtypeStruct((B, C, HW), x.dtype),
        grid_spec=pltpu.PrefetchScalarGridSpec(
            num_scalar_prefetch=0,
            grid=(B, n2),
            in_specs=[
                pl.BlockSpec((1, C, tile2), lambda b, t: (b, 0, t)),
                pl.BlockSpec((1, C, 1), lambda b, t: (b, 0, 0)),
            ],
            out_specs=pl.BlockSpec((1, C, tile2), lambda b, t: (b, 0, t)),
        ),
        compiler_params=pltpu.CompilerParams(
            dimension_semantics=("parallel", "parallel"),
            vmem_limit_bytes=vlim2),
        input_output_aliases=({0: 0} if alias_input else {}),
    )(x_flat, scale)

    return out.reshape(B, C, H, W)


# ------------------------------- wrapper ----------------------------------------

def cab_forward(x_nchw, w1, w2, *, max_block_bytes=None, force_tiled=False,
                alias_input=False):
    """CAB forward.  x_nchw: (B, C, H, W); w1: (R, C); w2: (C_out=C, R).

    alias_input=True aliases x with the output (halves HBM footprint when x is
    donatable; XLA inserts a copy if x is still live, so semantics are kept).
    """
    B, C, H, W = x_nchw.shape
    HW = H * W
    R = w1.shape[0]
    itemsize = x_nchw.dtype.itemsize

    # Tiny reduced dim -> VPU path (weights kept as-is); otherwise MXU path
    # with weights pre-transposed here so the kernel never transposes.
    use_mxu = R > 8
    if use_mxu:
        wa, wb = w1.T, w2.T             # (C, R), (R, C)
    else:
        wa, wb = w1, w2                 # (R, C), (C, R)

    # Per-TensorCore VMEM capacity; fall back to the smallest (v7x: 64 MiB).
    try:
        vmem_cap = int(pltpu.get_tpu_info().vmem_capacity_bytes)
    except Exception:
        vmem_cap = 64 << 20

    if max_block_bytes is None:
        # Larger streaming tiles on 128 MiB parts (v5e/v6e: amortize per-step
        # overhead toward the HBM roofline); tighter on 64 MiB parts (v7x).
        max_block_bytes = (12 << 20) if vmem_cap >= (96 << 20) else (6 << 20)

    # Honest resident-path VMEM accounting: sublane-padded C, lane-padded HW,
    # in + out double-buffered (4 blocks), plus weights and slack.
    # TODO(synk): for C < 8 (f32) fold part of HW into the sublane axis so
    # blocks are sublane-dense (full vreg occupancy for tiny channel counts).
    c_pad = _round_up(C, _sublane_pack(itemsize))
    hw128 = _round_up(HW, 128)
    resident_block = c_pad * hw128 * itemsize
    resident_bytes = 4 * resident_block + 4 * (w1.size + w2.size) + (1 << 20)

    if (not force_tiled) and resident_bytes <= int(0.75 * vmem_cap):
        return _cab_resident(x_nchw, wa, wb, use_mxu,
                             resident_bytes, vmem_cap, alias_input)
    return _cab_tiled(x_nchw, wa, wb, use_mxu, max_block_bytes, vmem_cap,
                      alias_input)


# ------------------------------ reference ----------------------------------------

def cab_reference(x, w1, w2):
    """Pure-JAX reference mirroring the PyTorch module."""
    avg_pool = jnp.mean(x, axis=(2, 3))                      # (B, C)
    max_pool = jnp.max(x, axis=(2, 3))                       # (B, C)

    def mlp(p):
        h = jnp.maximum(p @ w1.T, 0.0)
        return h @ w2.T

    out = mlp(avg_pool) + mlp(max_pool)                      # (B, C)
    scale = jax.nn.sigmoid(out)[:, :, None, None]
    return x * scale


if __name__ == "__main__":
    # Module config: in_channels=4 -> ratio clamps to 4 -> reduced_channels=1,
    # out_channels defaults to in_channels=4.
    B, C, H, W = 2, 4, 16, 16
    ratio = 16
    ratio = min(ratio, C)
    R = C // ratio          # reduced channels = 1
    C_out = C

    key = jax.random.PRNGKey(0)
    kx, k1, k2 = jax.random.split(key, 3)

    x = jax.random.normal(kx, (B, C, H, W), dtype=jnp.float32)
    # 1x1 conv weights (spatial kernel dims squeezed): fc1 (R, C), fc2 (C_out, R)
    w1 = jax.random.normal(k1, (R, C), dtype=jnp.float32) * 0.5
    w2 = jax.random.normal(k2, (C_out, R), dtype=jnp.float32) * 0.5

    # 1) VMEM-resident single-pass path, lane-aligned HW (16x16 = 256).
    y = jax.block_until_ready(cab_forward(x, w1, w2))
    y_ref = cab_reference(x, w1, w2)
    assert y.shape == (B, C, H, W)
    assert jnp.allclose(y, y_ref, atol=1e-5, rtol=1e-5), "resident path mismatch"

    # 2) Resident path with ragged HW (10x10 = 100): no wrapper pad/slice; the
    #    kernel reduces over the true logical extent.
    x_r = jax.random.normal(jax.random.PRNGKey(1), (2, C, 10, 10), dtype=jnp.float32)
    y_r = jax.block_until_ready(cab_forward(x_r, w1, w2))
    assert jnp.allclose(y_r, cab_reference(x_r, w1, w2), atol=1e-5, rtol=1e-5), \
        "resident ragged-HW path mismatch"

    # 3) Forced HW-tiled two-pass path with a ragged last tile (20x20 = 400 ->
    #    4 tiles of 128, last tile 16 valid lanes) + input/output aliasing on
    #    the apply pass.  Reference computed first (aliasing is only a hint).
    x_t = jax.random.normal(jax.random.PRNGKey(2), (2, C, 20, 20), dtype=jnp.float32)
    y_t_ref = cab_reference(x_t, w1, w2)
    y_t = jax.block_until_ready(
        cab_forward(x_t, w1, w2, force_tiled=True,
                    max_block_bytes=128 * C * 4, alias_input=True))
    assert jnp.allclose(y_t, y_t_ref, atol=1e-5, rtol=1e-5), "tiled path mismatch"

    # 4) MXU MLP path (reduced channels R > 8): C=128, ratio=8 -> R=16.
    C2, R2 = 128, 16
    xk, wk1, wk2 = jax.random.split(jax.random.PRNGKey(3), 3)
    x_m = jax.random.normal(xk, (2, C2, 16, 16), dtype=jnp.float32)
    w1_m = jax.random.normal(wk1, (R2, C2), dtype=jnp.float32) * 0.1
    w2_m = jax.random.normal(wk2, (C2, R2), dtype=jnp.float32) * 0.1
    y_m = jax.block_until_ready(cab_forward(x_m, w1_m, w2_m))
    assert jnp.allclose(y_m, cab_reference(x_m, w1_m, w2_m), atol=1e-4, rtol=1e-4), \
        "MXU MLP path mismatch"

    print("KERNEL_OK")
</pallas_src>

<mosaic_0001>
module attributes {stable_mosaic.version = 11 : i64} {
  func.func @_cab_resident_kernel(%arg0: i32, %arg1: memref<1x4x256xf32, #tpu.memory_space<vmem>>, %arg2: memref<1x4xf32, #tpu.memory_space<vmem>>, %arg3: memref<4x1xf32, #tpu.memory_space<vmem>>, %arg4: memref<1x4x256xf32, #tpu.memory_space<vmem>>) attributes {dimension_semantics = [#tpu.dimension_semantics<parallel>], iteration_bounds = array<i64: 2>, scalar_prefetch = 0 : i64, scratch_operands = 0 : i64, tpu.core_type = #tpu.core_type<tc>, window_params = [{transform_indices = @transform_0, window_bounds = array<i64: 1, 4, 256>}, {pipeline_mode = #tpu.pipeline_mode<synchronous>, transform_indices = @transform_1, window_bounds = array<i64: 1, 4>}, {pipeline_mode = #tpu.pipeline_mode<synchronous>, transform_indices = @transform_2, window_bounds = array<i64: 4, 1>}, {transform_indices = @transform_3, window_bounds = array<i64: 1, 4, 256>}]} {
    %c0 = arith.constant 0 : index
    %c0_0 = arith.constant 0 : index
    %c0_1 = arith.constant 0 : index
    %0 = vector.load %arg1[%c0, %c0_0, %c0_1] : memref<1x4x256xf32, #tpu.memory_space<vmem>>, vector<1x4x256xf32>
    %cst = arith.constant dense<0.000000e+00> : vector<1x4xf32>
    %1 = vector.multi_reduction <add>, %0, %cst [2] : vector<1x4x256xf32> to vector<1x4xf32>
    %cst_2 = arith.constant 3.906250e-03 : f32
    %2 = vector.broadcast %cst_2 : f32 to vector<1x4xf32>
    %3 = arith.mulf %1, %2 : vector<1x4xf32>
    %cst_3 = arith.constant dense<0xFF800000> : vector<1x4xf32>
    %4 = vector.multi_reduction <maximumf>, %0, %cst_3 [2] : vector<1x4x256xf32> to vector<1x4xf32>
    %5 = tpu.concatenate %3, %4 in 0 : vector<1x4xf32>, vector<1x4xf32> -> vector<2x4xf32>
    %c0_4 = arith.constant 0 : index
    %c0_5 = arith.constant 0 : index
    %6 = vector.load %arg2[%c0_4, %c0_5] : memref<1x4xf32, #tpu.memory_space<vmem>>, vector<1x4xf32>
    %c0_6 = arith.constant 0 : index
    %c0_7 = arith.constant 0 : index
    %7 = vector.load %arg3[%c0_6, %c0_7] : memref<4x1xf32, #tpu.memory_space<vmem>>, vector<4x1xf32>
    %8 = vector.shape_cast %5 : vector<2x4xf32> to vector<2x1x4xf32>
    %9 = vector.shape_cast %6 : vector<1x4xf32> to vector<1x1x4xf32>
    %10 = vector.broadcast %9 : vector<1x1x4xf32> to vector<2x1x4xf32>
    %11 = arith.mulf %8, %10 : vector<2x1x4xf32>
    %cst_8 = arith.constant dense<0.000000e+00> : vector<2x1xf32>
    %12 = vector.multi_reduction <add>, %11, %cst_8 [2] : vector<2x1x4xf32> to vector<2x1xf32>
    %cst_9 = arith.constant 0.000000e+00 : f32
    %13 = vector.broadcast %cst_9 : f32 to vector<2x1xf32>
    %14 = arith.maximumf %12, %13 : vector<2x1xf32>
    %15 = vector.shape_cast %14 : vector<2x1xf32> to vector<2x1x1xf32>
    %16 = vector.shape_cast %7 : vector<4x1xf32> to vector<1x4x1xf32>
    %17 = vector.broadcast %15 : vector<2x1x1xf32> to vector<2x4x1xf32>
    %18 = vector.broadcast %16 : vector<1x4x1xf32> to vector<2x4x1xf32>
    %19 = arith.mulf %17, %18 : vector<2x4x1xf32>
    %cst_10 = arith.constant dense<0.000000e+00> : vector<2x4xf32>
    %20 = vector.multi_reduction <add>, %19, %cst_10 [2] : vector<2x4x1xf32> to vector<2x4xf32>
    %21 = vector.extract_strided_slice %20 {offsets = [0, 0], sizes = [1, 4], strides = [1, 1]} : vector<2x4xf32> to vector<1x4xf32>
    %22 = vector.extract_strided_slice %20 {offsets = [1, 0], sizes = [1, 4], strides = [1, 1]} : vector<2x4xf32> to vector<1x4xf32>
    %23 = arith.addf %21, %22 : vector<1x4xf32>
    %24 = arith.negf %23 : vector<1x4xf32>
    %25 = math.exp %24 : vector<1x4xf32>
    %cst_11 = arith.constant 1.000000e+00 : f32
    %26 = vector.broadcast %cst_11 : f32 to vector<1x4xf32>
    %27 = arith.addf %26, %25 : vector<1x4xf32>
    %28 = arith.divf %26, %27 : vector<1x4xf32>
    %29 = vector.shape_cast %28 : vector<1x4xf32> to vector<1x4x1xf32>
    %30 = vector.broadcast %29 : vector<1x4x1xf32> to vector<1x4x256xf32>
    %31 = arith.mulf %0, %30 : vector<1x4x256xf32>
    %c0_12 = arith.constant 0 : index
    %c0_13 = arith.constant 0 : index
    %c0_14 = arith.constant 0 : index
    %32 = vector.load %arg4[%c0_12, %c0_13, %c0_14] : memref<1x4x256xf32, #tpu.memory_space<vmem>>, vector<1x4x256xf32>
    tpu.vector_store %arg4[%c0_12, %c0_13, %c0_14], %31 {strides = array<i32>} : memref<1x4x256xf32, #tpu.memory_space<vmem>>, vector<1x4x256xf32>,
    return
  }
  func.func @transform_0(%arg0: i32) -> (i32, i32, i32) {
    %c0_i32 = arith.constant 0 : i32
    %c0_i32_0 = arith.constant 0 : i32
    %c0_i32_1 = arith.constant 0 : i32
    return %arg0, %c0_i32, %c0_i32_0 : i32, i32, i32
  }
  func.func @transform_1(%arg0: i32) -> (i32, i32) {
    %c0_i32 = arith.constant 0 : i32
    %c0_i32_0 = arith.constant 0 : i32
    %c0_i32_1 = arith.constant 0 : i32
    return %c0_i32, %c0_i32_0 : i32, i32
  }
  func.func @transform_2(%arg0: i32) -> (i32, i32) {
    %c0_i32 = arith.constant 0 : i32
    %c0_i32_0 = arith.constant 0 : i32
    %c0_i32_1 = arith.constant 0 : i32
    return %c0_i32, %c0_i32_0 : i32, i32
  }
  func.func @transform_3(%arg0: i32) -> (i32, i32, i32) {
    %c0_i32 = arith.constant 0 : i32
    %c0_i32_0 = arith.constant 0 : i32
    %c0_i32_1 = arith.constant 0 : i32
    return %arg0, %c0_i32, %c0_i32_0 : i32, i32, i32
  }
}

</mosaic_0001>

<llo_original>
// kernel: tpu_custom_call.1
$region0: #{tpu_custom_call.1}
  #allocation0 [shape = 'u32[]', space=smem, size = 0x4, offset = 0x4, fixed_abs, tag = 'smem constant byte address 0x4 - core index']
  #allocation1 [shape = 'u32[144,128]{1,0:T(1,128)}', space=vmem, size = 0x12000, scoped, tag = 'internal scratch']
  %s0 = inlined_call_operand.hbm [shape: f32[2,4,256], index: 0, kind: input, shape index: {}]
  %s1 = inlined_call_operand.vmem [shape: f32[1,4], index: 1, kind: input, shape index: {}]
  %s2 = inlined_call_operand.vmem [shape: f32[4,1], index: 2, kind: input, shape index: {}]
  %s3 = inlined_call_operand.hbm [shape: f32[2,4,256], index: 3, kind: output, shape index: {}]
  %s4 = sld [smem:[#allocation0]]
  $region49: #{tpu_custom_call.1} parent=0
    _
  %s6 = ssub.s32 1, %s4
  %s7 = scalar_select 0, %s6, %s4
  $region1: #{tpu_custom_call.1} parent=0
    #allocation2 [shape = 'u8[8192]{0}', space=vmem, size = 0x2000, scoped, tag = 'input window, operand 0']
    #allocation3 [shape = 's32[2]{0}', space=sflag, size = 0x8, scoped, tag = 'scoped memory for tpu_custom_call.1']
    #allocation4 [shape = 's32[2]{0}', space=sflag, size = 0x8, scoped, tag = 'scoped memory for tpu_custom_call.1']
    #allocation5 [shape = 'u8[8192]{0}', space=vmem, size = 0x2000, scoped, tag = 'output window, operand 0']
    %8 = vsyncpa [#allocation3], 0
    %s9 = scalar_lea.sflag [#allocation3], 1
    %10 = vsyncpa %s9, 0
    %11 = vsyncpa [#allocation4], 0
    %s12 = scalar_lea.sflag [#allocation4], 1
    %13 = vsyncpa %s12, 0
    loop: start=0, step=1, limit=4
    $region2: #{tpu_custom_call.1} parent=1 // loop_pre_header
      _
    $region3: #{tpu_custom_call.1} parent=1 // loop_header
      %s15 = sphi 0, %s19
      %p16 = scmp.ge.s32.totalorder %s15, 4
      %s25 = sphi 0, %s27
      %s28 = sphi 0, %s25
      %s29 = sphi 0, %s28
      %s45 = sphi 0, %s29
      %s49 = sphi 0, %s49
      %s51 = sphi 0, %s49
      %s52 = sphi 0, %s51
      %s66 = sphi 0, %s52
      %s70 = sphi 0, %s70
      %s72 = sphi 0, %s70
      %s73 = sphi 0, %s72
      %s87 = sphi 0, %s73
      %s93 = sphi 0, %s95
      %s96 = sphi 0, %s93
      %s97 = sphi 0, %s96
      %s113 = sphi 0, %s97
    $region4: #{tpu_custom_call.1} parent=1 // loop_header_branch
      %18 = sbr.rel (%p16) target = $region8
    $region5: #{tpu_custom_call.1} parent=1 // loop_body
      %s20 = ssub.s32 %s15, 1
      %s21 = ssub.s32 %s15, 2
      %s22 = sadd.s32 %s15, 1
      %s23 = ssub.s32 %s15, %s22
      %p24 = scmp.eq.s32.totalorder %s23, 0
      %s26 = sadd.s32 %s25, 1
      %s27 = scalar_select %p24, %s25, %s26
      %p30 = pneg %p24
      %p31 = scmp.eq.s32.totalorder %s15, 1
      %p32 = por %p30, %p31
      %p33 = scmp.ne.s32.totalorder %s25, %s28
      %p34 = scmp.eq.s32.totalorder %s15, 0
      %p35 = por %p33, %p34
      %p36 = scmp.ne.s32.totalorder %s25, %s28
      %p37 = scmp.eq.s32.totalorder %s20, 1
      %p38 = por %p36, %p37
      %p39 = scmp.ne.s32.totalorder %s28, %s29
      %p40 = scmp.eq.s32.totalorder %s20, 0
      %p41 = por %p39, %p40
      %p42 = scmp.ne.s32.totalorder %s28, %s29
      %p43 = scmp.eq.s32.totalorder %s21, 1
      %p44 = por %p42, %p43
      %p46 = scmp.ne.s32.totalorder %s29, %s45
      %p47 = scmp.eq.s32.totalorder %s21, 0
      %p48 = por %p46, %p47
      %s50 = sadd.s32 %s49, 1
      %p53 = scmp.eq.s32.totalorder %s15, 1
      %p54 = scmp.ne.s32.totalorder %s49, %s51
      %p55 = scmp.eq.s32.totalorder %s15, 0
      %p56 = por %p54, %p55
      %p57 = scmp.ne.s32.totalorder %s49, %s51
      %p58 = scmp.eq.s32.totalorder %s20, 1
      %p59 = por %p57, %p58
      %p60 = scmp.ne.s32.totalorder %s51, %s52
      %p61 = scmp.eq.s32.totalorder %s20, 0
      %p62 = por %p60, %p61
      %p63 = scmp.ne.s32.totalorder %s51, %s52
      %p64 = scmp.eq.s32.totalorder %s21, 1
      %p65 = por %p63, %p64
      %p67 = scmp.ne.s32.totalorder %s52, %s66
      %p68 = scmp.eq.s32.totalorder %s21, 0
      %p69 = por %p67, %p68
      %s71 = sadd.s32 %s70, 1
      %p74 = scmp.eq.s32.totalorder %s15, 1
      %p75 = scmp.ne.s32.totalorder %s70, %s72
      %p76 = scmp.eq.s32.totalorder %s15, 0
      %p77 = por %p75, %p76
      %p78 = scmp.ne.s32.totalorder %s70, %s72
      %p79 = scmp.eq.s32.totalorder %s20, 1
      %p80 = por %p78, %p79
      %p81 = scmp.ne.s32.totalorder %s72, %s73
      %p82 = scmp.eq.s32.totalorder %s20, 0
      %p83 = por %p81, %p82
      %p84 = scmp.ne.s32.totalorder %s72, %s73
      %p85 = scmp.eq.s32.totalorder %s21, 1
      %p86 = por %p84, %p85
      %p88 = scmp.ne.s32.totalorder %s73, %s87
      %p89 = scmp.eq.s32.totalorder %s21, 0
      %p90 = por %p88, %p89
      %s91 = ssub.s32 %s15, %s22
      %p92 = scmp.eq.s32.totalorder %s91, 0
      %s94 = sadd.s32 %s93, 1
      %s95 = scalar_select %p92, %s93, %s94
      %p98 = pneg %p92
      %p99 = scmp.eq.s32.totalorder %s15, 1
      %p100 = por %p98, %p99
      %p101 = scmp.ne.s32.totalorder %s93, %s96
      %p102 = scmp.eq.s32.totalorder %s15, 0
      %p103 = por %p101, %p102
      %p104 = scmp.ne.s32.totalorder %s93, %s96
      %p105 = scmp.eq.s32.totalorder %s20, 1
      %p106 = por %p104, %p105
      %p107 = scmp.ne.s32.totalorder %s96, %s97
      %p108 = scmp.eq.s32.totalorder %s20, 0
      %p109 = por %p107, %p108
      %p110 = scmp.ne.s32.totalorder %s96, %s97
      %p111 = scmp.eq.s32.totalorder %s21, 1
      %p112 = por %p110, %p111
      %p114 = scmp.ne.s32.totalorder %s97, %s113
      %p115 = scmp.eq.s32.totalorder %s21, 0
      %p116 = por %p114, %p115
      %p117 = scmp.le.s32.totalorder 1, %s15
      %p118 = scmp.lt.s32.totalorder %s15, 3
      %p119 = pnand %p117, %p118
      %p120 = pneg %p119
      // Predicated region
      $region9: #{tpu_custom_call.1} parent=5 // pred_check
        _
      $region10: #{tpu_custom_call.1} parent=5 // pred_check_branch
        %122 = sbr.rel (%p119) target = $region12
      $region11: #{tpu_custom_call.1} parent=5 // pred_region
        %s123 = ssub.s32 %s15, 1
        // Predicated region
        $region13: #{tpu_custom_call.1} parent=11 // pred_check
          %p124 = pneg %p62
        $region14: #{tpu_custom_call.1} parent=11 // pred_check_branch
          %126 = sbr.rel (%p124) target = $region16
        $region15: #{tpu_custom_call.1} parent=11 // pred_region
          _
        $region16: #{tpu_custom_call.1} parent=11 // pred_fallthru
          _
        // Predicated region
        $region17: #{tpu_custom_call.1} parent=11 // pred_check
          %p127 = pneg %p83
        $region18: #{tpu_custom_call.1} parent=11 // pred_check_branch
          %129 = sbr.rel (%p127) target = $region20
        $region19: #{tpu_custom_call.1} parent=11 // pred_region
          _
        $region20: #{tpu_custom_call.1} parent=11 // pred_fallthru
          _
      $region12: #{tpu_custom_call.1} parent=5 // pred_fallthru
        _
      %p130 = scmp.lt.s32.totalorder %s15, 2
      // Predicated region
      $region21: #{tpu_custom_call.1} parent=5 // pred_check
        %p131 = pneg %p130
      $region22: #{tpu_custom_call.1} parent=5 // pred_check_branch
        %133 = sbr.rel (%p131) target = $region24
      $region23: #{tpu_custom_call.1} parent=5 // pred_region
        // Predicated region
        $region25: #{tpu_custom_call.1} parent=23 // pred_check
          %p134 = pneg %p35
        $region26: #{tpu_custom_call.1} parent=23 // pred_check_branch
          %136 = sbr.rel (%p134) target = $region28
        $region27: #{tpu_custom_call.1} parent=23 // pred_region
          %s137 = sand.u32 %s25, 1
          %s138 = scalar_lea.sflag [#allocation3], %s137
          %s139 = sand.u32 %s25, 1
          %s140 = smul.addr %s139, 8
          %s141 = scalar_lea.vmem [#allocation2], %s140
          %s143 = ssub.s32 128, 128
          %144 = vsyncadd %s138, %s143
          %s145 = smul.addr %s15, 2
          %s146 = smul.addr %s145, 64
          %s147 = scalar_lea.hbm %s0, %s146
          %s149 = sshll.u32 %s141, 4
          %s150 = int_to_ptr.vmem [resolvable:$true] %s149
          %152 = dma.hbm_to_vmem [thread:$0]  %s147, 128, %s150, %s138
        $region28: #{tpu_custom_call.1} parent=23 // pred_fallthru
          _
      $region24: #{tpu_custom_call.1} parent=5 // pred_fallthru
        _
      %p153 = scmp.le.s32.totalorder 1, %s15
      %p154 = scmp.lt.s32.totalorder %s15, 3
      %p155 = pnand %p153, %p154
      %p156 = pneg %p155
      // Predicated region
      $region29: #{tpu_custom_call.1} parent=5 // pred_check
        _
      $region30: #{tpu_custom_call.1} parent=5 // pred_check_branch
        %158 = sbr.rel (%p155) target = $region32
      $region31: #{tpu_custom_call.1} parent=5 // pred_region
        %s159 = ssub.s32 %s15, 1
        %s160 = sand.u32 %s28, 1
        %s161 = scalar_lea.sflag [#allocation3], %s160
        %s162 = sand.u32 %s28, 1
        %s163 = smul.addr %s162, 8
        %s164 = scalar_lea.vmem [#allocation2], %s163
        // Predicated region
        $region33: #{tpu_custom_call.1} parent=31 // pred_check
          %p165 = pneg %p41
        $region34: #{tpu_custom_call.1} parent=31 // pred_check_branch
          %167 = sbr.rel (%p165) target = $region36
        $region35: #{tpu_custom_call.1} parent=31 // pred_region
          %168 = dma.done %s161, 128
        $region36: #{tpu_custom_call.1} parent=31 // pred_fallthru
          _
        %s169 = sand.u32 %s28, 1
        %s170 = scalar_lea.sflag [#allocation3], %s169
        %s171 = sand.u32 %s28, 1
        %s172 = smul.addr %s171, 8
        %s173 = scalar_lea.vmem [#allocation2], %s172
        %p174 = pneg %p41
        %p175 = pneg %p38
        %p176 = pneg %p62
        %p177 = pneg %p59
        %p178 = pneg %p83
        %p179 = pneg %p80
        %p180 = pneg %p109
        %p181 = pneg %p106
        %s182 = sand.u32 %s96, 1
        %s183 = scalar_lea.sflag [#allocation4], %s182
        %s184 = sand.u32 %s96, 1
        %s185 = smul.addr %s184, 8
        %s186 = scalar_lea.vmem [#allocation5], %s185
        %v187 = vld [vmem:[%s164] sm:$0xff]
        %v189 = vcombine.high %v187, %v187
        %vm191 = vcmask 1043456
        %v192 = vsel %vm191, %v187, 0.0
        %v193 = vsel %vm191, %v189, 0.0
        %v194 = vadd.f32 %v192, %v193
        %195 = vadd.xlane.f32.xlu0 %v194
        %v196 = vpop.xlane.xlu0 %195
        %v197 = vmul.f32 %v196, 0.00390625
        %v198 = vsel %vm191, %v187, -inf
        %v199 = vsel %vm191, %v189, -inf
        %v200 = vmax.f32 %v198, %v199
        %201 = vmax.xlane.f32.xlu0 %v200
        %v202 = vpop.xlane.xlu0 %201
        %v204 = vlaneseq
        %v205 = vand.u32 %v204, 127
        %v206 = vlaneseq
        %v207 = vshrl.u32 %v206, 7
        %v208 = vsub.s32 %v205, %v207
        %v209 = vrot.slane %v197, %v208
        %v212 = vlaneseq
        %v213 = vshrl.u32 %v212, 7
        %v214 = vsub.s32 %v205, %v213
        %v215 = vrot.slane %v202, %v214
        %vm217 = vcmask 1040384
        %v218 = vsel %vm217, %v209, %v215
        %v219 = vld [vmem:[%s1] sm:$0x1]
        %v220 = vld [vmem:[%s2] sm:$0xf]
        %v223 = vunpack.c.l.s4 1966171168
        %v224 = vunpack.c.0.s8 %v223
        %v225 = vlaneseq
        %v226 = vshrl.u32 %v225, 7
        %v227 = vsub.s32 %v224, %v226
        %v228 = vrot.slane %v218, %v227
        %v229 = vcombine.high %v228, %v228
        %v231 = vunpack.c.l.s4 1966171168
        %v232 = vunpack.c.0.s8 %v231
        %v233 = vlaneseq
        %v234 = vshrl.u32 %v233, 7
        %v235 = vsub.s32 %v232, %v234
        %v236 = vrot.slane %v228, %v235
        %v238 = vunpack.c.l.s4 1966171168
        %v239 = vunpack.c.0.s8 %v238
        %v240 = vlaneseq
        %v241 = vshrl.u32 %v240, 7
        %v242 = vsub.s32 %v239, %v241
        %v243 = vrot.slane %v229, %v242
        %v246 = vmul.f32 %v236, %v219
        %v247 = vmul.f32 %v243, %v219
        %vm248 = vcmask 24576
        %v249 = vsel %vm248, %v246, 0.0
        %250 = vadd.xlane.f32.xlu0 %v249
        %v251 = vpop.xlane.xlu0 %250
        %v252 = vsel %vm248, %v247, 0.0
        %253 = vadd.xlane.f32.xlu0 %v252
        %v254 = vpop.xlane.xlu0 %253
        %v255 = vmax.f32 %v251, 0.0
        %v256 = vmax.f32 %v254, 0.0
        %v257 = vlaneseq
        %v258 = vshrl.u32 %v257, 7
        %v259 = vsub.s32 0, %v258
        %v260 = vrot.slane %v255, %v259
        %v261 = vlaneseq
        %v262 = vshrl.u32 %v261, 7
        %v263 = vsub.s32 0, %v262
        %v264 = vrot.slane %v256, %v263
        %v265 = vmul.f32 %v260, %v220
        %v266 = vmul.f32 %v264, %v220
        %v267 = vadd.f32 %v265, 0.0
        %v268 = vadd.f32 %v266, 0.0
        %v269 = vadd.f32 %v267, %v268
        %v270 = vxor.u32 %v269, 2147483648
        %v271 = vmul.f32 %v270, 1.442695
        %v272 = vpow.pop %v271
        %v273 = vadd.f32 %v272, 1.0
        %v274 = vrcp.pop %v273
        %v275 = vmul.f32 1.0, %v274
        %277 = vset.pattern.permute.xlu0 0
        %278 = vperm.xlu0 %277, %v275
        %v279 = vpop.permute.xlu0 %278
        %v281 = vunpack.c.l.s4 839922192
        %v282 = vunpack.c.0.s8 %v281
        %v283 = vlaneseq
        %v284 = vshrl.u32 %v283, 7
        %v285 = vsub.s32 %v282, %v284
        %v286 = vrot.slane %v279, %v285
        %v288 = vmul.f32 %v187, %v286
        %289 = vst [vmem:[%s186] sm:$0xff] %v288
        %s290 = sand.u32 %s96, 1
        %s291 = scalar_lea.sflag [#allocation4], %s290
        %s292 = sand.u32 %s96, 1
        %s293 = smul.addr %s292, 8
        %s294 = scalar_lea.vmem [#allocation5], %s293
        // Predicated region
        $region37: #{tpu_custom_call.1} parent=31 // pred_check
          %p295 = pneg %p106
        $region38: #{tpu_custom_call.1} parent=31 // pred_check_branch
          %297 = sbr.rel (%p295) target = $region40
        $region39: #{tpu_custom_call.1} parent=31 // pred_region
          %s299 = ssub.s32 128, 128
          %300 = vsyncadd %s291, %s299
          %s301 = smul.addr %s20, 2
          %s302 = smul.addr %s301, 64
          %s303 = scalar_lea.hbm %s3, %s302
          %s305 = sshll.u32 %s294, 4
          %s306 = int_to_ptr.vmem [resolvable:$true] %s305
          %308 = dma.vmem_to_hbm [thread:$0]  %s306, 128, %s303, %s291
        $region40: #{tpu_custom_call.1} parent=31 // pred_fallthru
          _
      $region32: #{tpu_custom_call.1} parent=5 // pred_fallthru
        _
      %p309 = scmp.le.s32.totalorder 2, %s15
      // Predicated region
      $region41: #{tpu_custom_call.1} parent=5 // pred_check
        %p310 = pneg %p309
      $region42: #{tpu_custom_call.1} parent=5 // pred_check_branch
        %312 = sbr.rel (%p310) target = $region44
      $region43: #{tpu_custom_call.1} parent=5 // pred_region
        %s313 = ssub.s32 %s15, 2
        // Predicated region
        $region45: #{tpu_custom_call.1} parent=43 // pred_check
          %p314 = pneg %p112
        $region46: #{tpu_custom_call.1} parent=43 // pred_check_branch
          %316 = sbr.rel (%p314) target = $region48
        $region47: #{tpu_custom_call.1} parent=43 // pred_region
          %s317 = sand.u32 %s97, 1
          %s318 = scalar_lea.sflag [#allocation4], %s317
          %s319 = sand.u32 %s97, 1
          %s320 = smul.addr %s319, 8
          %s321 = scalar_lea.vmem [#allocation5], %s320
          %322 = dma.done %s318, 128
        $region48: #{tpu_custom_call.1} parent=43 // pred_fallthru
          _
      $region44: #{tpu_custom_call.1} parent=5 // pred_fallthru
        _
    $region6: #{tpu_custom_call.1} parent=1 // loop_footer
      %s19 = sadd.s32 1, %s15
    $region7: #{tpu_custom_call.1} parent=1 // loop_footer_branch
      %14 = sbr.rel target = $region3
    $region8: #{tpu_custom_call.1} parent=1 // loop_exit
      _
    %323 = vsyncpa [#allocation3], 1
    %s324 = scalar_lea.sflag [#allocation3], 1
    %325 = vsyncpa %s324, 1
    %326 = vsyncpa [#allocation4], 1
    %s327 = scalar_lea.sflag [#allocation4], 1
    %328 = vsyncpa %s327, 1

</llo_original>
